<compile_context>
chip_gen: v7x
topology: tpu7x:2x2x1
jax: 0.10.0
libtpu: 0.0.40
codegen_flags: <defaults>
</compile_context>

<pallas_src>
import jax
import jax.numpy as jnp
from jax import lax
from jax.experimental import pallas as pl
from jax.experimental.pallas import tpu as pltpu


def _round_up(x, m):
    return ((x + m - 1) // m) * m


def _mclr_kernel(x_ref, w_ref, b_ref, o_ref):
    # x_ref: (TM, D), w_ref: (C, D), b_ref: (C, 1), o_ref: (C, TM)
    # Linear layer on the MXU: (C, TM) = W @ x^T, contracting both on D,
    # accumulating in f32.  Batch is the lane axis -> lane-dense epilogue.
    logits = lax.dot_general(
        w_ref[...], x_ref[...],
        dimension_numbers=(((1,), (1,)), ((), ())),
        preferred_element_type=jnp.float32,
    ) + b_ref[...]                                   # bias broadcasts over lanes

    # Numerically stable log_softmax over the class (sublane) axis.
    m = jnp.max(logits, axis=0, keepdims=True)       # (1, TM)
    z = logits - m
    lse = jnp.log(jnp.sum(jnp.exp(z), axis=0, keepdims=True))
    o_ref[...] = (z - lse).astype(o_ref.dtype)


def mclr_logistic_forward(x, weight, bias, *, batch_tile=2048):
    """x: any shape with leading batch dim; weight: (C, D); bias: (C,)."""
    batch = x.shape[0]
    x2d = x.reshape(batch, -1)                       # torch.flatten(x, 1)

    # Keep a narrow input narrow (x dominates HBM traffic); otherwise f32.
    if x2d.dtype == jnp.bfloat16:
        compute_dtype = jnp.bfloat16
    else:
        compute_dtype = jnp.float32
        if x2d.dtype != jnp.float32:
            x2d = x2d.astype(jnp.float32)
    w = weight.astype(compute_dtype)                 # (C, D), native lane-dense layout
    b2d = bias.reshape(-1, 1).astype(jnp.float32)    # (C, 1)

    out_dim, in_dim = w.shape
    assert x2d.shape[1] == in_dim

    if batch <= 256:
        # Single block; full-extent dims satisfy the (8, 128) rule directly.
        tm = batch
    else:
        # tm is the lane dim of the (C, tm) output block -> multiple of 128.
        # Keep >= 2 grid steps so "parallel" can span both v7x TensorCores.
        tm = min(batch_tile, _round_up(pl.cdiv(batch, 2), 128))
    grid = (pl.cdiv(batch, tm),)

    # Explicit VMEM budget: the double-buffered x tile dominates; add the
    # padded output buffers, resident W/b and some headroom.
    vmem_bytes = (
        2 * tm * in_dim * x2d.dtype.itemsize
        + 2 * _round_up(out_dim, 8) * _round_up(max(tm, 128), 128) * 4
        + 2 * _round_up(out_dim, 8) * _round_up(in_dim, 128) * w.dtype.itemsize
        + (4 << 20)
    )
    vmem_bytes = int(min(max(vmem_bytes, 16 << 20), 48 << 20))

    out_t = pl.pallas_call(
        _mclr_kernel,
        out_shape=jax.ShapeDtypeStruct((out_dim, batch), jnp.float32),
        grid_spec=pltpu.PrefetchScalarGridSpec(
            num_scalar_prefetch=0,
            grid=grid,
            in_specs=[
                pl.BlockSpec((tm, in_dim), lambda i: (i, 0)),       # x tile
                pl.BlockSpec((out_dim, in_dim), lambda i: (0, 0)),  # W resident
                pl.BlockSpec((out_dim, 1), lambda i: (0, 0)),       # b resident
            ],
            out_specs=pl.BlockSpec((out_dim, tm), lambda i: (0, i)),
        ),
        compiler_params=pltpu.CompilerParams(
            dimension_semantics=("parallel",),
            vmem_limit_bytes=vmem_bytes,
        ),
    )(x2d, w, b2d)

    # (C, batch) -> (batch, C) to match the PyTorch module's output layout.
    # Tiny array; the transpose cost is negligible next to reading x.
    return out_t.T


if __name__ == "__main__":
    input_dim = 784   # 1 * 28 * 28, as in the default module
    output_dim = 10
    batch = 2

    key = jax.random.PRNGKey(0)
    kx, kw, kb = jax.random.split(key, 3)

    # Deterministic parameter init (PyTorch nn.Linear style uniform bound).
    bound = 1.0 / jnp.sqrt(jnp.float32(input_dim))
    weight = jax.random.uniform(kw, (output_dim, input_dim), jnp.float32,
                                minval=-bound, maxval=bound)
    bias = jax.random.uniform(kb, (output_dim,), jnp.float32,
                              minval=-bound, maxval=bound)

    # Example input in NCHW, flattened inside the wrapper.
    x = jax.random.normal(kx, (batch, 1, 28, 28), jnp.float32)

    out = mclr_logistic_forward(x, weight, bias)
    jax.block_until_ready(out)

    # Reference: plain-JAX log_softmax(x @ W^T + b).
    x2d = x.reshape(batch, -1)
    ref = jax.nn.log_softmax(x2d @ weight.T + bias, axis=-1)

    row_sums = jnp.exp(out).sum(axis=1)
    assert out.shape == (batch, output_dim)
    assert jnp.allclose(row_sums, jnp.ones_like(row_sums), atol=1e-5)
    assert jnp.allclose(out, ref, atol=5e-5, rtol=5e-5)

    print("KERNEL_OK")
</pallas_src>

<mosaic_0001>
module attributes {stable_mosaic.version = 11 : i64} {
  func.func @_mclr_kernel(%arg0: i32, %arg1: memref<2x784xf32, #tpu.memory_space<vmem>>, %arg2: memref<10x784xf32, #tpu.memory_space<vmem>>, %arg3: memref<10x1xf32, #tpu.memory_space<vmem>>, %arg4: memref<10x2xf32, #tpu.memory_space<vmem>>) attributes {dimension_semantics = [#tpu.dimension_semantics<parallel>], iteration_bounds = array<i64: 1>, scalar_prefetch = 0 : i64, scratch_operands = 0 : i64, tpu.core_type = #tpu.core_type<tc>, window_params = [{transform_indices = @transform_0, window_bounds = array<i64: 2, 784>}, {pipeline_mode = #tpu.pipeline_mode<synchronous>, transform_indices = @transform_1, window_bounds = array<i64: 10, 784>}, {pipeline_mode = #tpu.pipeline_mode<synchronous>, transform_indices = @transform_2, window_bounds = array<i64: 10, 1>}, {transform_indices = @transform_3, window_bounds = array<i64: 10, 2>}]} {
    %c0 = arith.constant 0 : index
    %c0_0 = arith.constant 0 : index
    %0 = vector.load %arg2[%c0, %c0_0] : memref<10x784xf32, #tpu.memory_space<vmem>>, vector<10x784xf32>
    %c0_1 = arith.constant 0 : index
    %c0_2 = arith.constant 0 : index
    %1 = vector.load %arg1[%c0_1, %c0_2] : memref<2x784xf32, #tpu.memory_space<vmem>>, vector<2x784xf32>
    %cst = arith.constant dense<0.000000e+00> : vector<10x2xf32>
    %2 = tpu.matmul %0, %1, %cst {dimension_numbers = #tpu.dot_dimension_numbers<[1], [1], [0], [0], [0, 0, 1, 0], [], []>} : vector<10x784xf32>, vector<2x784xf32>, vector<10x2xf32> -> vector<10x2xf32>
    %c0_3 = arith.constant 0 : index
    %c0_4 = arith.constant 0 : index
    %3 = vector.load %arg3[%c0_3, %c0_4] : memref<10x1xf32, #tpu.memory_space<vmem>>, vector<10x1xf32>
    %4 = vector.broadcast %3 : vector<10x1xf32> to vector<10x2xf32>
    %5 = arith.addf %2, %4 : vector<10x2xf32>
    %cst_5 = arith.constant dense<0xFF800000> : vector<2xf32>
    %6 = vector.multi_reduction <maximumf>, %5, %cst_5 [0] : vector<10x2xf32> to vector<2xf32>
    %7 = vector.shape_cast %6 : vector<2xf32> to vector<1x2xf32>
    %8 = vector.broadcast %7 : vector<1x2xf32> to vector<10x2xf32>
    %9 = arith.subf %5, %8 : vector<10x2xf32>
    %10 = math.exp %9 : vector<10x2xf32>
    %cst_6 = arith.constant dense<0.000000e+00> : vector<2xf32>
    %11 = vector.multi_reduction <add>, %10, %cst_6 [0] : vector<10x2xf32> to vector<2xf32>
    %12 = vector.shape_cast %11 : vector<2xf32> to vector<1x2xf32>
    %13 = math.log %12 : vector<1x2xf32>
    %14 = vector.broadcast %13 : vector<1x2xf32> to vector<10x2xf32>
    %15 = arith.subf %9, %14 : vector<10x2xf32>
    %c0_7 = arith.constant 0 : index
    %c0_8 = arith.constant 0 : index
    %16 = vector.load %arg4[%c0_7, %c0_8] : memref<10x2xf32, #tpu.memory_space<vmem>>, vector<10x2xf32>
    tpu.vector_store %arg4[%c0_7, %c0_8], %15 {strides = array<i32>} : memref<10x2xf32, #tpu.memory_space<vmem>>, vector<10x2xf32>,
    return
  }
  func.func @transform_0(%arg0: i32) -> (i32, i32) {
    %c0_i32 = arith.constant 0 : i32
    %c0_i32_0 = arith.constant 0 : i32
    return %arg0, %c0_i32 : i32, i32
  }
  func.func @transform_1(%arg0: i32) -> (i32, i32) {
    %c0_i32 = arith.constant 0 : i32
    %c0_i32_0 = arith.constant 0 : i32
    %c0_i32_1 = arith.constant 0 : i32
    return %c0_i32, %c0_i32_0 : i32, i32
  }
  func.func @transform_2(%arg0: i32) -> (i32, i32) {
    %c0_i32 = arith.constant 0 : i32
    %c0_i32_0 = arith.constant 0 : i32
    %c0_i32_1 = arith.constant 0 : i32
    return %c0_i32, %c0_i32_0 : i32, i32
  }
  func.func @transform_3(%arg0: i32) -> (i32, i32) {
    %c0_i32 = arith.constant 0 : i32
    %c0_i32_0 = arith.constant 0 : i32
    return %c0_i32, %arg0 : i32, i32
  }
}

</mosaic_0001>

<llo_original>
// kernel: tpu_custom_call.1
$region0: #{tpu_custom_call.1}
  #allocation0 [shape = 'u32[]', space=smem, size = 0x4, offset = 0x4, fixed_abs, tag = 'smem constant byte address 0x4 - core index']
  #allocation1 [shape = 'u32[144,128]{1,0:T(1,128)}', space=vmem, size = 0x12000, scoped, tag = 'internal scratch']
  %s0 = inlined_call_operand.vmem [shape: f32[2,784], index: 0, kind: input, shape index: {}]
  %s1 = inlined_call_operand.hbm [shape: f32[10,784], index: 1, kind: input, shape index: {}]
  %s2 = inlined_call_operand.vmem [shape: f32[10,1], index: 2, kind: input, shape index: {}]
  %s3 = inlined_call_operand.vmem [shape: f32[10,2], index: 3, kind: output, shape index: {}]
  %s4 = sld [smem:[#allocation0]]
  $region26: #{tpu_custom_call.1} parent=0
    _
  %s6 = ssub.s32 1, %s4
  %s7 = scalar_select 0, %s6, %s4
  $region1: #{tpu_custom_call.1} parent=0
    #allocation2 [shape = 'u8[57344]{0}', space=vmem, size = 0xe000, scoped, tag = 'input window, operand 1, single buffered']
    #allocation3 [shape = 's32[1]{0}', space=sflag, size = 0x4, scoped, tag = 'scoped memory for tpu_custom_call.1']
    %8 = vsyncpa [#allocation3], 0
    // Predicated region
    $region2: #{tpu_custom_call.1} parent=1 // pred_check
      _
    $region3: #{tpu_custom_call.1} parent=1 // pred_check_branch
      %10 = sbr.rel (0) target = $region5
    $region4: #{tpu_custom_call.1} parent=1 // pred_region
      _
    $region5: #{tpu_custom_call.1} parent=1 // pred_fallthru
      _
    // Predicated region
    $region6: #{tpu_custom_call.1} parent=1 // pred_check
      _
    $region7: #{tpu_custom_call.1} parent=1 // pred_check_branch
      %12 = sbr.rel (0) target = $region9
    $region8: #{tpu_custom_call.1} parent=1 // pred_region
      %s14 = ssub.s32 1792, 1792
      %15 = vsyncadd [#allocation3], %s14
      %s16 = sshll.u32 [#allocation2], 4
      %s17 = int_to_ptr.vmem [resolvable:$true] %s16
      %22 = dma.hbm_to_vmem [thread:$0]  %s1, 1792, %s17, [#allocation3], 896, 896, 56
    $region9: #{tpu_custom_call.1} parent=1 // pred_fallthru
      _
    // Predicated region
    $region10: #{tpu_custom_call.1} parent=1 // pred_check
      _
    $region11: #{tpu_custom_call.1} parent=1 // pred_check_branch
      %24 = sbr.rel (0) target = $region13
    $region12: #{tpu_custom_call.1} parent=1 // pred_region
      _
    $region13: #{tpu_custom_call.1} parent=1 // pred_fallthru
      _
    // Predicated region
    $region14: #{tpu_custom_call.1} parent=1 // pred_check
      _
    $region15: #{tpu_custom_call.1} parent=1 // pred_check_branch
      %26 = sbr.rel (0) target = $region17
    $region16: #{tpu_custom_call.1} parent=1 // pred_region
      %27 = dma.done [#allocation3], 1792
    $region17: #{tpu_custom_call.1} parent=1 // pred_fallthru
      _
    %v28 = vld [vmem:[#allocation2] sm:$0xff]
    %v29 = vld [vmem:[#allocation2 + $0x8] sm:$0xff]
    %v30 = vld [vmem:[#allocation2 + $0x10] sm:$0xff]
    %v31 = vld [vmem:[#allocation2 + $0x18] sm:$0xff]
    %v32 = vld [vmem:[#allocation2 + $0x20] sm:$0xff]
    %v33 = vld [vmem:[#allocation2 + $0x28] sm:$0xff]
    %v34 = vld [vmem:[#allocation2 + $0x30] sm:$0xff]
    %v35 = vld [vmem:[#allocation2 + $0x38] sm:$0x3]
    %v36 = vld [vmem:[#allocation2 + $0x40] sm:$0x3]
    %v37 = vld [vmem:[#allocation2 + $0x48] sm:$0x3]
    %v38 = vld [vmem:[#allocation2 + $0x50] sm:$0x3]
    %v39 = vld [vmem:[#allocation2 + $0x58] sm:$0x3]
    %v40 = vld [vmem:[#allocation2 + $0x60] sm:$0x3]
    %v41 = vld [vmem:[#allocation2 + $0x68] sm:$0x3]
    %v42 = vld [vmem:[%s0] sm:$0xff]
    %v43 = vld [vmem:[%s0 + $0x8] sm:$0x3f]
    %v44 = vld [vmem:[%s2] sm:$0xff]
    %v45 = vld [vmem:[%s2 + $0x8] sm:$0x3]
    %47 = vset.pattern.permute.xlu0 0
    %48 = vperm.xlu0 %47, %v44
    %v49 = vpop.permute.xlu0 %48
    %52 = vset.pattern.permute.xlu0 0
    %53 = vperm.xlu0 %52, %v45
    %v54 = vpop.permute.xlu0 %53
    %v58 = vcombine.high %v42, %v42
    %v60 = vunpack.c.l.s4 1983009808
    %v61 = vunpack.c.0.s8 %v60
    %v62 = vlaneseq
    %v63 = vshrl.u32 %v62, 7
    %v64 = vsub.s32 %v61, %v63
    %v65 = vrot.slane %v42, %v64
    %v67 = vunpack.c.l.s4 1983009808
    %v68 = vunpack.c.0.s8 %v67
    %v69 = vlaneseq
    %v70 = vshrl.u32 %v69, 7
    %v71 = vsub.s32 %v68, %v70
    %v72 = vrot.slane %v58, %v71
    %v73 = vcombine.high %v65, %v65
    %v74 = vcombine.high %v72, %v72
    %v75 = vcombine.high %v43, %v43
    %v77 = vunpack.c.l.s4 1983009808
    %v78 = vunpack.c.0.s8 %v77
    %v79 = vlaneseq
    %v80 = vshrl.u32 %v79, 7
    %v81 = vsub.s32 %v78, %v80
    %v82 = vrot.slane %v43, %v81
    %v84 = vunpack.c.l.s4 1983009808
    %v85 = vunpack.c.0.s8 %v84
    %v86 = vlaneseq
    %v87 = vshrl.u32 %v86, 7
    %v88 = vsub.s32 %v85, %v87
    %v89 = vrot.slane %v75, %v88
    %v90 = vcombine.high %v82, %v82
    %vm97 = vcmask 130048
    %v99 = vsel %vm97, %v34, 0
    %v102 = vsel %vm97, %v41, 0
    %v104 = vsel %vm97, %v89, 0
    %106 = vmatprep.subr.mxu0 %v73
    %107 = vmatpush1.xpose.msra.mxu0 %v65
    %108 = vmatprep.subr.mxu0 0.0
    %109 = vmatpush1.xpose.msra.mxu0 0.0
    %110 = vmatprep.subr.mxu0 0.0
    %111 = vmatpush1.xpose.msra.mxu0 0.0
    %112 = vmatprep.subr.mxu0 0.0
    %113 = vmatpush1.xpose.msra.mxu0 0.0
    %114 = vmatprep.subr.mxu0 0.0
    %115 = vmatpush1.xpose.msra.mxu0 0.0
    %116 = vmatprep.subr.mxu0 0.0
    %117 = vmatpush1.xpose.msra.mxu0 0.0
    %118 = vmatprep.subr.mxu0 0.0
    %119 = vmatpush1.xpose.msra.mxu0 0.0
    %120 = vmatprep.subr.mxu0 0.0
    %121 = vmatpush1.xpose.msra.mxu0 0.0
    %122 = vmatprep.subr.mxu0 0.0
    %123 = vmatpush1.xpose.msra.mxu0 0.0
    %124 = vmatprep.subr.mxu0 0.0
    %125 = vmatpush1.xpose.msra.mxu0 0.0
    %126 = vmatprep.subr.mxu0 0.0
    %127 = vmatpush1.xpose.msra.mxu0 0.0
    %128 = vmatprep.subr.mxu0 0.0
    %129 = vmatpush1.xpose.msra.mxu0 0.0
    %130 = vmatprep.subr.mxu0 0.0
    %131 = vmatpush1.xpose.msra.mxu0 0.0
    %132 = vmatprep.subr.mxu0 0.0
    %133 = vmatpush1.xpose.msra.mxu0 0.0
    %134 = vmatprep.subr.mxu0 0.0
    %135 = vmatpush1.xpose.msra.mxu0 0.0
    %136 = vmatprep.subr.mxu0 0.0
    %137 = vmatpush1.xpose.msra.mxu0 0.0
    %138 = vmatprep.subr.mxu0 0.0
    %139 = vmatpush1.xpose.msra.mxu0 0.0
    %140 = vmatprep.subr.mxu0 0.0
    %141 = vmatpush1.xpose.msra.mxu0 0.0
    %142 = vmatprep.subr.mxu0 0.0
    %143 = vmatpush1.xpose.msra.mxu0 0.0
    %144 = vmatprep.subr.mxu0 0.0
    %145 = vmatpush1.xpose.msra.mxu0 0.0
    %146 = vmatprep.subr.mxu0 0.0
    %147 = vmatpush1.xpose.msra.mxu0 0.0
    %148 = vmatprep.subr.mxu0 0.0
    %149 = vmatpush1.xpose.msra.mxu0 0.0
    %150 = vmatprep.subr.mxu0 0.0
    %151 = vmatpush1.xpose.msra.mxu0 0.0
    %152 = vmatprep.subr.mxu0 0.0
    %153 = vmatpush1.xpose.msra.mxu0 0.0
    %154 = vmatprep.subr.mxu0 0.0
    %155 = vmatpush1.xpose.msra.mxu0 0.0
    %156 = vmatprep.subr.mxu0 0.0
    %157 = vmatpush1.xpose.msra.mxu0 0.0
    %158 = vmatprep.subr.mxu0 0.0
    %159 = vmatpush1.xpose.msra.mxu0 0.0
    %160 = vmatprep.subr.mxu0 0.0
    %161 = vmatpush1.xpose.msra.mxu0 0.0
    %162 = vmatprep.subr.mxu0 0.0
    %163 = vmatpush1.xpose.msra.mxu0 0.0
    %164 = vmatprep.subr.mxu0 0.0
    %165 = vmatpush1.xpose.msra.mxu0 0.0
    %166 = vmatprep.subr.mxu0 0.0
    %167 = vmatpush1.xpose.msra.mxu0 0.0
    %168 = vmatprep.subr.mxu0 0.0
    %169 = vmatpush1.xpose.msra.mxu0 0.0
    %170 = vmatprep.mubr.f32.mxu0 %v29
    %171 = vmatmul.mubr.f32.gmra.mrb[0].mxu0 %v28
    %v172 = vpop.f32.mrb[0].mxu0
    %v173 = vadd.f32 %v49, %v172
    %v174 = vpop.f32.mrb[0].mxu0
    %175 = vmatprep.mubr.f32.mxu0 %v36
    %176 = vmatmul.mubr.f32.gmra.mrb[0].mxu0 %v35
    %v177 = vpop.f32.mrb[0].mxu0
    %v178 = vadd.f32 %v54, %v177
    %v179 = vpop.f32.mrb[0].mxu0
    %180 = vdwg.mxu0
    %181 = vmatprep.subr.mxu0 %v74
    %182 = vmatpush1.xpose.msra.mxu0 %v72
    %183 = vmatprep.subr.mxu0 0.0
    %184 = vmatpush1.xpose.msra.mxu0 0.0
    %185 = vmatprep.subr.mxu0 0.0
    %186 = vmatpush1.xpose.msra.mxu0 0.0
    %187 = vmatprep.subr.mxu0 0.0
    %188 = vmatpush1.xpose.msra.mxu0 0.0
    %189 = vmatprep.subr.mxu0 0.0
    %190 = vmatpush1.xpose.msra.mxu0 0.0
    %191 = vmatprep.subr.mxu0 0.0
    %192 = vmatpush1.xpose.msra.mxu0 0.0
    %193 = vmatprep.subr.mxu0 0.0
    %194 = vmatpush1.xpose.msra.mxu0 0.0
    %195 = vmatprep.subr.mxu0 0.0
    %196 = vmatpush1.xpose.msra.mxu0 0.0
    %197 = vmatprep.subr.mxu0 0.0
    %198 = vmatpush1.xpose.msra.mxu0 0.0
    %199 = vmatprep.subr.mxu0 0.0
    %200 = vmatpush1.xpose.msra.mxu0 0.0
    %201 = vmatprep.subr.mxu0 0.0
    %202 = vmatpush1.xpose.msra.mxu0 0.0
    %203 = vmatprep.subr.mxu0 0.0
    %204 = vmatpush1.xpose.msra.mxu0 0.0
    %205 = vmatprep.subr.mxu0 0.0
    %206 = vmatpush1.xpose.msra.mxu0 0.0
    %207 = vmatprep.subr.mxu0 0.0
    %208 = vmatpush1.xpose.msra.mxu0 0.0
    %209 = vmatprep.subr.mxu0 0.0
    %210 = vmatpush1.xpose.msra.mxu0 0.0
    %211 = vmatprep.subr.mxu0 0.0
    %212 = vmatpush1.xpose.msra.mxu0 0.0
    %213 = vmatprep.subr.mxu0 0.0
    %214 = vmatpush1.xpose.msra.mxu0 0.0
    %215 = vmatprep.subr.mxu0 0.0
    %216 = vmatpush1.xpose.msra.mxu0 0.0
    %217 = vmatprep.subr.mxu0 0.0
    %218 = vmatpush1.xpose.msra.mxu0 0.0
    %219 = vmatprep.subr.mxu0 0.0
    %220 = vmatpush1.xpose.msra.mxu0 0.0
    %221 = vmatprep.subr.mxu0 0.0
    %222 = vmatpush1.xpose.msra.mxu0 0.0
    %223 = vmatprep.subr.mxu0 0.0
    %224 = vmatpush1.xpose.msra.mxu0 0.0
    %225 = vmatprep.subr.mxu0 0.0
    %226 = vmatpush1.xpose.msra.mxu0 0.0
    %227 = vmatprep.subr.mxu0 0.0
    %228 = vmatpush1.xpose.msra.mxu0 0.0
    %229 = vmatprep.subr.mxu0 0.0
    %230 = vmatpush1.xpose.msra.mxu0 0.0
    %231 = vmatprep.subr.mxu0 0.0
    %232 = vmatpush1.xpose.msra.mxu0 0.0
    %233 = vmatprep.subr.mxu0 0.0
    %234 = vmatpush1.xpose.msra.mxu0 0.0
    %235 = vmatprep.subr.mxu0 0.0
    %236 = vmatpush1.xpose.msra.mxu0 0.0
    %237 = vmatprep.subr.mxu0 0.0
    %238 = vmatpush1.xpose.msra.mxu0 0.0
    %239 = vmatprep.subr.mxu0 0.0
    %240 = vmatpush1.xpose.msra.mxu0 0.0
    %241 = vmatprep.subr.mxu0 0.0
    %242 = vmatpush1.xpose.msra.mxu0 0.0
    %243 = vmatprep.subr.mxu0 0.0
    %244 = vmatpush1.xpose.msra.mxu0 0.0
    %245 = vmatprep.mubr.f32.mxu0 %v31
    %246 = vmatmul.mubr.f32.gmra.mrb[0].mxu0 %v30
    %v247 = vpop.f32.mrb[0].mxu0
    %v248 = vadd.f32 %v173, %v247
    %v249 = vpop.f32.mrb[0].mxu0
    %250 = vmatprep.mubr.f32.mxu0 %v38
    %251 = vmatmul.mubr.f32.gmra.mrb[0].mxu0 %v37
    %v252 = vpop.f32.mrb[0].mxu0
    %v253 = vadd.f32 %v178, %v252
    %v254 = vpop.f32.mrb[0].mxu0
    %255 = vdwg.mxu0
    %256 = vmatprep.subr.mxu0 %v90
    %257 = vmatpush1.xpose.msra.mxu0 %v82
    %258 = vmatprep.subr.mxu0 0.0
    %259 = vmatpush1.xpose.msra.mxu0 0.0
    %260 = vmatprep.subr.mxu0 0.0
    %261 = vmatpush1.xpose.msra.mxu0 0.0
    %262 = vmatprep.subr.mxu0 0.0
    %263 = vmatpush1.xpose.msra.mxu0 0.0
    %264 = vmatprep.subr.mxu0 0.0
    %265 = vmatpush1.xpose.msra.mxu0 0.0
    %266 = vmatprep.subr.mxu0 0.0
    %267 = vmatpush1.xpose.msra.mxu0 0.0
    %268 = vmatprep.subr.mxu0 0.0
    %269 = vmatpush1.xpose.msra.mxu0 0.0
    %270 = vmatprep.subr.mxu0 0.0
    %271 = vmatpush1.xpose.msra.mxu0 0.0
    %272 = vmatprep.subr.mxu0 0.0
    %273 = vmatpush1.xpose.msra.mxu0 0.0
    %274 = vmatprep.subr.mxu0 0.0
    %275 = vmatpush1.xpose.msra.mxu0 0.0
    %276 = vmatprep.subr.mxu0 0.0
    %277 = vmatpush1.xpose.msra.mxu0 0.0
    %278 = vmatprep.subr.mxu0 0.0
    %279 = vmatpush1.xpose.msra.mxu0 0.0
    %280 = vmatprep.subr.mxu0 0.0
    %281 = vmatpush1.xpose.msra.mxu0 0.0
    %282 = vmatprep.subr.mxu0 0.0
    %283 = vmatpush1.xpose.msra.mxu0 0.0
    %284 = vmatprep.subr.mxu0 0.0
    %285 = vmatpush1.xpose.msra.mxu0 0.0
    %286 = vmatprep.subr.mxu0 0.0
    %287 = vmatpush1.xpose.msra.mxu0 0.0
    %288 = vmatprep.subr.mxu0 0.0
    %289 = vmatpush1.xpose.msra.mxu0 0.0
    %290 = vmatprep.subr.mxu0 0.0
    %291 = vmatpush1.xpose.msra.mxu0 0.0
    %292 = vmatprep.subr.mxu0 0.0
    %293 = vmatpush1.xpose.msra.mxu0 0.0
    %294 = vmatprep.subr.mxu0 0.0
    %295 = vmatpush1.xpose.msra.mxu0 0.0
    %296 = vmatprep.subr.mxu0 0.0
    %297 = vmatpush1.xpose.msra.mxu0 0.0
    %298 = vmatprep.subr.mxu0 0.0
    %299 = vmatpush1.xpose.msra.mxu0 0.0
    %300 = vmatprep.subr.mxu0 0.0
    %301 = vmatpush1.xpose.msra.mxu0 0.0
    %302 = vmatprep.subr.mxu0 0.0
    %303 = vmatpush1.xpose.msra.mxu0 0.0
    %304 = vmatprep.subr.mxu0 0.0
    %305 = vmatpush1.xpose.msra.mxu0 0.0
    %306 = vmatprep.subr.mxu0 0.0
    %307 = vmatpush1.xpose.msra.mxu0 0.0
    %308 = vmatprep.subr.mxu0 0.0
    %309 = vmatpush1.xpose.msra.mxu0 0.0
    %310 = vmatprep.subr.mxu0 0.0
    %311 = vmatpush1.xpose.msra.mxu0 0.0
    %312 = vmatprep.subr.mxu0 0.0
    %313 = vmatpush1.xpose.msra.mxu0 0.0
    %314 = vmatprep.subr.mxu0 0.0
    %315 = vmatpush1.xpose.msra.mxu0 0.0
    %316 = vmatprep.subr.mxu0 0.0
    %317 = vmatpush1.xpose.msra.mxu0 0.0
    %318 = vmatprep.subr.mxu0 0.0
    %319 = vmatpush1.xpose.msra.mxu0 0.0
    %320 = vmatprep.mubr.f32.mxu0 %v33
    %321 = vmatmul.mubr.f32.gmra.mrb[0].mxu0 %v32
    %v322 = vpop.f32.mrb[0].mxu0
    %v323 = vadd.f32 %v248, %v322
    %v324 = vpop.f32.mrb[0].mxu0
    %325 = vmatprep.mubr.f32.mxu0 %v40
    %326 = vmatmul.mubr.f32.gmra.mrb[0].mxu0 %v39
    %v327 = vpop.f32.mrb[0].mxu0
    %v328 = vadd.f32 %v253, %v327
    %v329 = vpop.f32.mrb[0].mxu0
    %330 = vdwg.mxu0
    %331 = vmatprep.subr.mxu0 0.0
    %332 = vmatpush1.xpose.msra.mxu0 %v104
    %333 = vmatprep.subr.mxu0 0.0
    %334 = vmatpush1.xpose.msra.mxu0 0.0
    %335 = vmatprep.subr.mxu0 0.0
    %336 = vmatpush1.xpose.msra.mxu0 0.0
    %337 = vmatprep.subr.mxu0 0.0
    %338 = vmatpush1.xpose.msra.mxu0 0.0
    %339 = vmatprep.subr.mxu0 0.0
    %340 = vmatpush1.xpose.msra.mxu0 0.0
    %341 = vmatprep.subr.mxu0 0.0
    %342 = vmatpush1.xpose.msra.mxu0 0.0
    %343 = vmatprep.subr.mxu0 0.0
    %344 = vmatpush1.xpose.msra.mxu0 0.0
    %345 = vmatprep.subr.mxu0 0.0
    %346 = vmatpush1.xpose.msra.mxu0 0.0
    %347 = vmatprep.subr.mxu0 0.0
    %348 = vmatpush1.xpose.msra.mxu0 0.0
    %349 = vmatprep.subr.mxu0 0.0
    %350 = vmatpush1.xpose.msra.mxu0 0.0
    %351 = vmatprep.subr.mxu0 0.0
    %352 = vmatpush1.xpose.msra.mxu0 0.0
    %353 = vmatprep.subr.mxu0 0.0
    %354 = vmatpush1.xpose.msra.mxu0 0.0
    %355 = vmatprep.subr.mxu0 0.0
    %356 = vmatpush1.xpose.msra.mxu0 0.0
    %357 = vmatprep.subr.mxu0 0.0
    %358 = vmatpush1.xpose.msra.mxu0 0.0
    %359 = vmatprep.subr.mxu0 0.0
    %360 = vmatpush1.xpose.msra.mxu0 0.0
    %361 = vmatprep.subr.mxu0 0.0
    %362 = vmatpush1.xpose.msra.mxu0 0.0
    %363 = vmatprep.subr.mxu0 0.0
    %364 = vmatpush1.xpose.msra.mxu0 0.0
    %365 = vmatprep.subr.mxu0 0.0
    %366 = vmatpush1.xpose.msra.mxu0 0.0
    %367 = vmatprep.subr.mxu0 0.0
    %368 = vmatpush1.xpose.msra.mxu0 0.0
    %369 = vmatprep.subr.mxu0 0.0
    %370 = vmatpush1.xpose.msra.mxu0 0.0
    %371 = vmatprep.subr.mxu0 0.0
    %372 = vmatpush1.xpose.msra.mxu0 0.0
    %373 = vmatprep.subr.mxu0 0.0
    %374 = vmatpush1.xpose.msra.mxu0 0.0
    %375 = vmatprep.subr.mxu0 0.0
    %376 = vmatpush1.xpose.msra.mxu0 0.0
    %377 = vmatprep.subr.mxu0 0.0
    %378 = vmatpush1.xpose.msra.mxu0 0.0
    %379 = vmatprep.subr.mxu0 0.0
    %380 = vmatpush1.xpose.msra.mxu0 0.0
    %381 = vmatprep.subr.mxu0 0.0
    %382 = vmatpush1.xpose.msra.mxu0 0.0
    %383 = vmatprep.subr.mxu0 0.0
    %384 = vmatpush1.xpose.msra.mxu0 0.0
    %385 = vmatprep.subr.mxu0 0.0
    %386 = vmatpush1.xpose.msra.mxu0 0.0
    %387 = vmatprep.subr.mxu0 0.0
    %388 = vmatpush1.xpose.msra.mxu0 0.0
    %389 = vmatprep.subr.mxu0 0.0
    %390 = vmatpush1.xpose.msra.mxu0 0.0
    %391 = vmatprep.subr.mxu0 0.0
    %392 = vmatpush1.xpose.msra.mxu0 0.0
    %393 = vmatprep.subr.mxu0 0.0
    %394 = vmatpush1.xpose.msra.mxu0 0.0
    %395 = vmatprep.mubr.f32.mxu0 0.0
    %396 = vmatmul.mubr.f32.gmra.mrb[0].mxu0 %v99
    %v397 = vpop.f32.mrb[0].mxu0
    %v398 = vadd.f32 %v323, %v397
    %v399 = vpop.f32.mrb[0].mxu0
    %400 = vmatprep.mubr.f32.mxu0 0.0
    %401 = vmatmul.mubr.f32.gmra.mrb[0].mxu0 %v102
    %v402 = vpop.f32.mrb[0].mxu0
    %v403 = vadd.f32 %v328, %v402
    %v404 = vpop.f32.mrb[0].mxu0
    %405 = vdwg.mxu0
    %vm406 = vcmask 15360
    %v407 = vsel %vm406, %v398, -inf
    %vm408 = vcmask 9216
    %v409 = vsel %vm408, %v403, -inf
    %v410 = vmax.f32 %v407, %v409
    %v411 = vrot.slane %v410, 4
    %v412 = vmax.f32 %v410, %v411
    %v413 = vrot.slane %v412, 2
    %v414 = vmax.f32 %v412, %v413
    %v415 = vrot.slane %v414, 1
    %v416 = vmax.f32 %v414, %v415
    %v417 = vsub.f32 %v398, %v416
    %v418 = vsub.f32 %v403, %v416
    %v419 = vmul.f32 %v417, 1.442695
    %v420 = vpow.pop %v419
    %v421 = vmul.f32 %v418, 1.442695
    %v422 = vpow.pop %v421
    %v423 = vsel %vm406, %v420, 0.0
    %v424 = vsel %vm408, %v422, 0.0
    %v425 = vadd.f32 %v423, %v424
    %v426 = vrot.slane %v425, 4
    %v427 = vadd.f32 %v425, %v426
    %v428 = vrot.slane %v427, 2
    %v429 = vadd.f32 %v427, %v428
    %v430 = vrot.slane %v429, 1
    %v431 = vadd.f32 %v429, %v430
    %v432 = vlog2.pop %v431
    %v433 = vmul.f32 %v432, 0.6931472
    %v434 = vsub.f32 %v417, %v433
    %v435 = vsub.f32 %v418, %v433
    %436 = vst.msk [vmem:[%s3] sm:$0xff] %vm406, %v434
    %437 = vst.msk [vmem:[%s3 + $0x8] sm:$0x3] %vm408, %v435
    // Predicated region
    $region18: #{tpu_custom_call.1} parent=1 // pred_check
      _
    $region19: #{tpu_custom_call.1} parent=1 // pred_check_branch
      %439 = sbr.rel (0) target = $region21
    $region20: #{tpu_custom_call.1} parent=1 // pred_region
      _
    $region21: #{tpu_custom_call.1} parent=1 // pred_fallthru
      _
    // Predicated region
    $region22: #{tpu_custom_call.1} parent=1 // pred_check
      _
    $region23: #{tpu_custom_call.1} parent=1 // pred_check_branch
      %441 = sbr.rel (0) target = $region25
    $region24: #{tpu_custom_call.1} parent=1 // pred_region
      _
    $region25: #{tpu_custom_call.1} parent=1 // pred_fallthru
      _
    %442 = vsyncpa [#allocation3], 1

</llo_original>
